<compile_context>
chip_gen: v6e
topology: v6e:2x2x1
jax: 0.10.0
libtpu: 0.0.40
codegen_flags: <defaults>
</compile_context>

<pallas_src>
import jax
import jax.numpy as jnp
from jax.experimental import pallas as pl
from jax.experimental.pallas import tpu as pltpu


def _skew_kernel(w_ref, o_ref):
    # w_ref: (3, T)  components w0, w1, w2 on the sublane axis, batch on lanes
    # o_ref: (9, T)  skew-matrix entries row-major (s00, s01, s02, s10, ..., s22)
    w0 = w_ref[0:1, :]
    w1 = w_ref[1:2, :]
    w2 = w_ref[2:3, :]
    zero = jnp.zeros_like(w0)

    o_ref[0:1, :] = zero      # (0,0)
    o_ref[1:2, :] = -w2       # (0,1)
    o_ref[2:3, :] = w1        # (0,2)
    o_ref[3:4, :] = w2        # (1,0)
    o_ref[4:5, :] = zero      # (1,1)
    o_ref[5:6, :] = -w0       # (1,2)
    o_ref[6:7, :] = -w1       # (2,0)
    o_ref[7:8, :] = w0        # (2,1)
    o_ref[8:9, :] = zero      # (2,2)


def get_skew(dw, tile_n=2048):
    """dw: (bn, 3) -> skew: (bn, 3, 3) float32."""
    bn = dw.shape[0]
    assert dw.shape[1] == 3

    n = bn
    x = dw.astype(jnp.float32)
    xt = x.T                                   # (3, N), lane-dense along N

    # Clamp the lane tile for tiny inputs; keep it a multiple of 128.
    tile = min(tile_n, max(128, pl.cdiv(n, 128) * 128))
    grid = (pl.cdiv(n, tile),)                 # ragged last block handled by Pallas

    out = pl.pallas_call(
        _skew_kernel,
        out_shape=jax.ShapeDtypeStruct((9, n), jnp.float32),
        grid=grid,
        in_specs=[pl.BlockSpec((3, tile), lambda i: (0, i))],
        out_specs=pl.BlockSpec((9, tile), lambda i: (0, i)),
        compiler_params=pltpu.CompilerParams(
            dimension_semantics=("parallel",)),
    )(xt)

    # Layout plumbing back to the (bn, 3, 3) the module contract requires.
    return out.T.reshape(bn, 3, 3)


def _reference(dw):
    """Pure-JAX reference replicating the PyTorch module."""
    bn = dw.shape[0]
    x = dw.astype(jnp.float32)
    w0, w1, w2 = x[:, 0], x[:, 1], x[:, 2]
    z = jnp.zeros_like(w0)
    rows = jnp.stack([z, -w2, w1,
                      w2, z, -w0,
                      -w1, w0, z], axis=-1)
    return rows.reshape(bn, 3, 3)


if __name__ == "__main__":
    bn = 8
    key = jax.random.PRNGKey(0)
    dw = jax.random.normal(key, (bn, 3), dtype=jnp.float32)

    skew = get_skew(dw)
    skew = jax.block_until_ready(skew)

    skew_ref = _reference(dw)
    assert skew.shape == (bn, 3, 3)
    assert skew.dtype == jnp.float32
    assert jnp.allclose(skew, skew_ref, atol=1e-6, rtol=1e-6)

    print("KERNEL_OK")
</pallas_src>

<mosaic_0001>
module attributes {stable_mosaic.version = 11 : i64} {
  func.func @_skew_kernel(%arg0: i32, %arg1: memref<3x128xf32, #tpu.memory_space<vmem>>, %arg2: memref<9x128xf32, #tpu.memory_space<vmem>>) attributes {dimension_semantics = [#tpu.dimension_semantics<parallel>], iteration_bounds = array<i64: 1>, scalar_prefetch = 0 : i64, scratch_operands = 0 : i64, tpu.core_type = #tpu.core_type<tc>, window_params = [{transform_indices = @transform_0, window_bounds = array<i64: 3, 128>}, {transform_indices = @transform_1, window_bounds = array<i64: 9, 128>}]} {
    %c0 = arith.constant 0 : index
    %c0_0 = arith.constant 0 : index
    %0 = vector.load %arg1[%c0, %c0_0] : memref<3x128xf32, #tpu.memory_space<vmem>>, vector<1x128xf32>
    %c1 = arith.constant 1 : index
    %c0_1 = arith.constant 0 : index
    %1 = vector.load %arg1[%c1, %c0_1] : memref<3x128xf32, #tpu.memory_space<vmem>>, vector<1x128xf32>
    %c2 = arith.constant 2 : index
    %c0_2 = arith.constant 0 : index
    %2 = vector.load %arg1[%c2, %c0_2] : memref<3x128xf32, #tpu.memory_space<vmem>>, vector<1x128xf32>
    %cst = arith.constant 0.000000e+00 : f32
    %3 = vector.broadcast %cst : f32 to vector<1x128xf32>
    %c0_3 = arith.constant 0 : index
    %c0_4 = arith.constant 0 : index
    %4 = vector.load %arg2[%c0_3, %c0_4] : memref<9x128xf32, #tpu.memory_space<vmem>>, vector<1x128xf32>
    tpu.vector_store %arg2[%c0_3, %c0_4], %3 {strides = array<i32>} : memref<9x128xf32, #tpu.memory_space<vmem>>, vector<1x128xf32>,
    %cst_5 = arith.constant 0.000000e+00 : f32
    %5 = vector.broadcast %cst_5 : f32 to vector<1x128xf32>
    %6 = arith.subf %5, %2 : vector<1x128xf32>
    %c1_6 = arith.constant 1 : index
    %c0_7 = arith.constant 0 : index
    %7 = vector.load %arg2[%c1_6, %c0_7] : memref<9x128xf32, #tpu.memory_space<vmem>>, vector<1x128xf32>
    tpu.vector_store %arg2[%c1_6, %c0_7], %6 {strides = array<i32>} : memref<9x128xf32, #tpu.memory_space<vmem>>, vector<1x128xf32>,
    %c2_8 = arith.constant 2 : index
    %c0_9 = arith.constant 0 : index
    %8 = vector.load %arg2[%c2_8, %c0_9] : memref<9x128xf32, #tpu.memory_space<vmem>>, vector<1x128xf32>
    tpu.vector_store %arg2[%c2_8, %c0_9], %1 {strides = array<i32>} : memref<9x128xf32, #tpu.memory_space<vmem>>, vector<1x128xf32>,
    %c3 = arith.constant 3 : index
    %c0_10 = arith.constant 0 : index
    %9 = vector.load %arg2[%c3, %c0_10] : memref<9x128xf32, #tpu.memory_space<vmem>>, vector<1x128xf32>
    tpu.vector_store %arg2[%c3, %c0_10], %2 {strides = array<i32>} : memref<9x128xf32, #tpu.memory_space<vmem>>, vector<1x128xf32>,
    %c4 = arith.constant 4 : index
    %c0_11 = arith.constant 0 : index
    %10 = vector.load %arg2[%c4, %c0_11] : memref<9x128xf32, #tpu.memory_space<vmem>>, vector<1x128xf32>
    tpu.vector_store %arg2[%c4, %c0_11], %3 {strides = array<i32>} : memref<9x128xf32, #tpu.memory_space<vmem>>, vector<1x128xf32>,
    %cst_12 = arith.constant 0.000000e+00 : f32
    %11 = vector.broadcast %cst_12 : f32 to vector<1x128xf32>
    %12 = arith.subf %11, %0 : vector<1x128xf32>
    %c5 = arith.constant 5 : index
    %c0_13 = arith.constant 0 : index
    %13 = vector.load %arg2[%c5, %c0_13] : memref<9x128xf32, #tpu.memory_space<vmem>>, vector<1x128xf32>
    tpu.vector_store %arg2[%c5, %c0_13], %12 {strides = array<i32>} : memref<9x128xf32, #tpu.memory_space<vmem>>, vector<1x128xf32>,
    %cst_14 = arith.constant 0.000000e+00 : f32
    %14 = vector.broadcast %cst_14 : f32 to vector<1x128xf32>
    %15 = arith.subf %14, %1 : vector<1x128xf32>
    %c6 = arith.constant 6 : index
    %c0_15 = arith.constant 0 : index
    %16 = vector.load %arg2[%c6, %c0_15] : memref<9x128xf32, #tpu.memory_space<vmem>>, vector<1x128xf32>
    tpu.vector_store %arg2[%c6, %c0_15], %15 {strides = array<i32>} : memref<9x128xf32, #tpu.memory_space<vmem>>, vector<1x128xf32>,
    %c7 = arith.constant 7 : index
    %c0_16 = arith.constant 0 : index
    %17 = vector.load %arg2[%c7, %c0_16] : memref<9x128xf32, #tpu.memory_space<vmem>>, vector<1x128xf32>
    tpu.vector_store %arg2[%c7, %c0_16], %0 {strides = array<i32>} : memref<9x128xf32, #tpu.memory_space<vmem>>, vector<1x128xf32>,
    %c8 = arith.constant 8 : index
    %c0_17 = arith.constant 0 : index
    %18 = vector.load %arg2[%c8, %c0_17] : memref<9x128xf32, #tpu.memory_space<vmem>>, vector<1x128xf32>
    tpu.vector_store %arg2[%c8, %c0_17], %3 {strides = array<i32>} : memref<9x128xf32, #tpu.memory_space<vmem>>, vector<1x128xf32>,
    return
  }
  func.func @transform_0(%arg0: i32) -> (i32, i32) {
    %c0_i32 = arith.constant 0 : i32
    %c0_i32_0 = arith.constant 0 : i32
    return %c0_i32, %arg0 : i32, i32
  }
  func.func @transform_1(%arg0: i32) -> (i32, i32) {
    %c0_i32 = arith.constant 0 : i32
    %c0_i32_0 = arith.constant 0 : i32
    return %c0_i32, %arg0 : i32, i32
  }
}

</mosaic_0001>

<llo_original>
// kernel: tpu_custom_call.1
$region0: #{tpu_custom_call.1}
  #allocation0 [shape = 'u32[]', space=smem, size = 0x4, offset = 0x4, fixed_abs, tag = 'smem constant byte address 0x4 - core index']
  #allocation1 [shape = 'u32[144,128]{1,0:T(1,128)}', space=vmem, size = 0x12000, scoped, tag = 'internal scratch']
  %s0 = inlined_call_operand.hbm [shape: f32[3,8], index: 0, kind: input, shape index: {}]
  %s1 = inlined_call_operand.vmem [shape: f32[9,8], index: 1, kind: output, shape index: {}]
  %s2 = sld [smem:[#allocation0]]
  $region18: #{tpu_custom_call.1} parent=0
    _
  %s4 = ssub.s32 1, %s2
  %s5 = scalar_select 0, %s4, %s2
  $region1: #{tpu_custom_call.1} parent=0
    #allocation2 [shape = 'u8[2048]{0}', space=vmem, size = 0x800, scoped, tag = 'input window, operand 0, single buffered']
    #allocation3 [shape = 's32[1]{0}', space=sflag, size = 0x4, scoped, tag = 'scoped memory for tpu_custom_call.1']
    %6 = vsyncpa [#allocation3], 0
    // Predicated region
    $region2: #{tpu_custom_call.1} parent=1 // pred_check
      _
    $region3: #{tpu_custom_call.1} parent=1 // pred_check_branch
      %8 = sbr.rel (0) target = $region5
    $region4: #{tpu_custom_call.1} parent=1 // pred_region
      %s10 = ssub.s32 64, 64
      %11 = vsyncadd [#allocation3], %s10
      %s13 = sshll.u32 [#allocation2], 4
      %s14 = int_to_ptr.vmem [resolvable:$true] %s13
      %16 = dma.hbm_to_vmem [thread:$0]  %s0, 64, %s14, [#allocation3]
    $region5: #{tpu_custom_call.1} parent=1 // pred_fallthru
      _
    // Predicated region
    $region6: #{tpu_custom_call.1} parent=1 // pred_check
      _
    $region7: #{tpu_custom_call.1} parent=1 // pred_check_branch
      %18 = sbr.rel (0) target = $region9
    $region8: #{tpu_custom_call.1} parent=1 // pred_region
      %19 = dma.done [#allocation3], 64
    $region9: #{tpu_custom_call.1} parent=1 // pred_fallthru
      _
    %v20 = vld [vmem:[#allocation2] sm:$0x1]
    %v21 = vld [vmem:[#allocation2 + $0x1] sm:$0x1]
    %v22 = vld [vmem:[#allocation2 + $0x2] sm:$0x1]
    %23 = vst [vmem:[%s1] sm:$0x1] 0.0
    %v24 = vsub.f32 0.0, %v22
    %25 = vst [vmem:[%s1 + $0x1] sm:$0x1] %v24
    %26 = vst [vmem:[%s1 + $0x2] sm:$0x1] %v21
    %27 = vst [vmem:[%s1 + $0x3] sm:$0x1] %v22
    %28 = vst [vmem:[%s1 + $0x4] sm:$0x1] 0.0
    %v29 = vsub.f32 0.0, %v20
    %30 = vst [vmem:[%s1 + $0x5] sm:$0x1] %v29
    %v31 = vsub.f32 0.0, %v21
    %32 = vst [vmem:[%s1 + $0x6] sm:$0x1] %v31
    %33 = vst [vmem:[%s1 + $0x7] sm:$0x1] %v20
    %34 = vst [vmem:[%s1 + $0x8] sm:$0x1] 0.0
    // Predicated region
    $region10: #{tpu_custom_call.1} parent=1 // pred_check
      _
    $region11: #{tpu_custom_call.1} parent=1 // pred_check_branch
      %36 = sbr.rel (0) target = $region13
    $region12: #{tpu_custom_call.1} parent=1 // pred_region
      _
    $region13: #{tpu_custom_call.1} parent=1 // pred_fallthru
      _
    // Predicated region
    $region14: #{tpu_custom_call.1} parent=1 // pred_check
      _
    $region15: #{tpu_custom_call.1} parent=1 // pred_check_branch
      %38 = sbr.rel (0) target = $region17
    $region16: #{tpu_custom_call.1} parent=1 // pred_region
      _
    $region17: #{tpu_custom_call.1} parent=1 // pred_fallthru
      _
    %39 = vsyncpa [#allocation3], 1

</llo_original>
